<compile_context>
chip_gen: v7x
topology: tpu7x:2x2x1
jax: 0.10.0
libtpu: 0.0.40
codegen_flags: <defaults>
</compile_context>

<pallas_src>
import jax
import jax.numpy as jnp
from jax.experimental import pallas as pl
from jax.experimental.pallas import tpu as pltpu


def _round_up(x, m):
    return ((x + m - 1) // m) * m


def actor_kernel(x_ref, w1_ref, b1_ref, w2_ref, b2_ref, o_ref):
    # fc1 -> ReLU -> fc2, f32 MXU accumulation, f32 bias/ReLU (required on v5e).
    x = x_ref[...]                                                     # [TB, S]
    h = jnp.dot(x, w1_ref[...], preferred_element_type=jnp.float32)   # [TB, H] f32
    h = jnp.maximum(h + b1_ref[...], 0.0)                             # bias + ReLU (f32)
    h = h.astype(w2_ref.dtype)                                         # match W2 for MXU
    y = jnp.dot(h, w2_ref[...], preferred_element_type=jnp.float32)   # [TB, A] f32
    o_ref[...] = (y + b2_ref[...]).astype(o_ref.dtype)


def actor_forward(state, w1, b1, w2, b2, *, block_b=4096):
    """Fused Actor forward.

    state: [B, S] (float32 or bfloat16) -> [B, A] float32.
    block_b: max batch-tile rows (rounded to the dtype's sublane multiple).
    """
    B, S = state.shape
    H = w1.shape[1]
    A = w2.shape[1]

    # Cast only the (tiny) weights to the state dtype; never cast the batch
    # itself in the wrapper (that would double input HBM traffic).
    w1 = w1.astype(state.dtype)
    w2 = w2.astype(state.dtype)
    b1 = b1.astype(jnp.float32).reshape(1, H)
    b2 = b2.astype(jnp.float32).reshape(1, A)

    # Sublane multiple for the batch tile: 8 rows for 4-byte, 16 for 2-byte dtypes.
    sub = {4: 8, 2: 16, 1: 32}.get(state.dtype.itemsize, 8)

    tb_cap = _round_up(block_b, sub)
    if B >= 256:
        # Ensure at least 2 grid steps for large batches so the "parallel"
        # batch axis shards across both TensorCores on v7x.
        tb_cap = min(tb_cap, _round_up(pl.cdiv(B, 2), sub))
    tb = max(sub, min(tb_cap, _round_up(B, sub)))
    grid = (pl.cdiv(B, tb),)  # ragged last tile handled by Pallas partial blocks

    itemsize = state.dtype.itemsize
    cost = pl.CostEstimate(
        flops=2 * B * (S * H + H * A),
        transcendentals=0,
        bytes_accessed=(B * S * itemsize            # state in
                        + B * A * 4                 # output
                        + w1.size * w1.dtype.itemsize
                        + w2.size * w2.dtype.itemsize
                        + b1.size * 4 + b2.size * 4),
    )

    out = pl.pallas_call(
        actor_kernel,
        out_shape=jax.ShapeDtypeStruct((B, A), jnp.float32),
        grid=grid,
        in_specs=[
            pl.BlockSpec((tb, S), lambda i: (i, 0)),     # state: tiled over batch
            pl.BlockSpec((S, H), lambda i: (0, 0)),      # W1: VMEM-resident
            pl.BlockSpec((1, H), lambda i: (0, 0)),      # b1: VMEM-resident
            pl.BlockSpec((H, A), lambda i: (0, 0)),      # W2: VMEM-resident
            pl.BlockSpec((1, A), lambda i: (0, 0)),      # b2: VMEM-resident
        ],
        out_specs=pl.BlockSpec((tb, A), lambda i: (i, 0)),
        compiler_params=pltpu.CompilerParams(
            dimension_semantics=("parallel",),           # batch axis: megacore-friendly
        ),
        cost_estimate=cost,
    )(state, w1, b1, w2, b2)

    return out


def init_actor_params(key, state_size, action_size, hidden=64):
    """Deterministic init mimicking nn.Linear default (U[-1/sqrt(fan_in), 1/sqrt(fan_in)])."""
    k1, k2, k3, k4 = jax.random.split(key, 4)
    bound1 = 1.0 / (state_size ** 0.5)
    bound2 = 1.0 / (hidden ** 0.5)
    w1 = jax.random.uniform(k1, (state_size, hidden), jnp.float32, -bound1, bound1)
    b1 = jax.random.uniform(k2, (1, hidden), jnp.float32, -bound1, bound1)
    w2 = jax.random.uniform(k3, (hidden, action_size), jnp.float32, -bound2, bound2)
    b2 = jax.random.uniform(k4, (1, action_size), jnp.float32, -bound2, bound2)
    return w1, b1, w2, b2


if __name__ == "__main__":
    # BipedalWalker-v3 dimensions
    STATE_SIZE = 24
    ACTION_SIZE = 4

    key = jax.random.PRNGKey(0)
    k_params, k_small, k_big = jax.random.split(key, 3)
    w1, b1, w2, b2 = init_actor_params(k_params, STATE_SIZE, ACTION_SIZE)

    # 1) Small inference-style batch (single ragged block, grid=(1,)).
    state_small = jax.random.normal(k_small, (2, STATE_SIZE), jnp.float32)
    out_small = jax.block_until_ready(actor_forward(state_small, w1, b1, w2, b2))
    ref_small = jnp.maximum(state_small @ w1 + b1, 0.0) @ w2 + b2
    assert out_small.shape == (2, ACTION_SIZE)
    assert jnp.allclose(out_small, ref_small, atol=1e-5, rtol=1e-5)

    # 2) Replay-buffer-style batch: multi-step grid with a ragged last tile
    #    (B=1000, block_b=256 -> tiles of 256, last tile 232 rows).
    B_BIG = 1000
    state_big = jax.random.normal(k_big, (B_BIG, STATE_SIZE), jnp.float32)
    ref_big = jnp.maximum(state_big @ w1 + b1, 0.0) @ w2 + b2
    out_big = jax.block_until_ready(
        actor_forward(state_big, w1, b1, w2, b2, block_b=256))
    assert out_big.shape == (B_BIG, ACTION_SIZE)
    assert jnp.allclose(out_big, ref_big, atol=1e-4, rtol=1e-4)

    # 3) Default large-tile path: B=1000 splits into 2 tiles of ~504 rows
    #    (>= 2 grid steps so both v7x TensorCores get work).
    out_def = jax.block_until_ready(actor_forward(state_big, w1, b1, w2, b2))
    assert jnp.allclose(out_def, ref_big, atol=1e-4, rtol=1e-4)

    # 4) bf16 replay-buffer storage path: the batch arrives already in bf16
    #    (no wrapper-side cast); weights follow, accumulation stays f32.
    state_bf16 = state_big.astype(jnp.bfloat16)
    out_bf16 = jax.block_until_ready(actor_forward(state_bf16, w1, b1, w2, b2))
    assert out_bf16.shape == (B_BIG, ACTION_SIZE)
    assert jnp.allclose(out_bf16, ref_big, atol=5e-2, rtol=5e-2)

    print("KERNEL_OK")
</pallas_src>

<mosaic_0001>
module attributes {stable_mosaic.version = 11 : i64} {
  func.func @actor_kernel(%arg0: i32, %arg1: memref<8x24xf32, #tpu.memory_space<vmem>>, %arg2: memref<24x64xf32, #tpu.memory_space<vmem>>, %arg3: memref<1x64xf32, #tpu.memory_space<vmem>>, %arg4: memref<64x4xf32, #tpu.memory_space<vmem>>, %arg5: memref<1x4xf32, #tpu.memory_space<vmem>>, %arg6: memref<8x4xf32, #tpu.memory_space<vmem>>) attributes {dimension_semantics = [#tpu.dimension_semantics<parallel>], iteration_bounds = array<i64: 1>, scalar_prefetch = 0 : i64, scratch_operands = 0 : i64, tpu.core_type = #tpu.core_type<tc>, window_params = [{transform_indices = @transform_0, window_bounds = array<i64: 8, 24>}, {pipeline_mode = #tpu.pipeline_mode<synchronous>, transform_indices = @transform_1, window_bounds = array<i64: 24, 64>}, {pipeline_mode = #tpu.pipeline_mode<synchronous>, transform_indices = @transform_2, window_bounds = array<i64: 1, 64>}, {pipeline_mode = #tpu.pipeline_mode<synchronous>, transform_indices = @transform_3, window_bounds = array<i64: 64, 4>}, {pipeline_mode = #tpu.pipeline_mode<synchronous>, transform_indices = @transform_4, window_bounds = array<i64: 1, 4>}, {transform_indices = @transform_5, window_bounds = array<i64: 8, 4>}]} {
    %c0 = arith.constant 0 : index
    %c0_0 = arith.constant 0 : index
    %0 = vector.load %arg1[%c0, %c0_0] : memref<8x24xf32, #tpu.memory_space<vmem>>, vector<8x24xf32>
    %c0_1 = arith.constant 0 : index
    %c0_2 = arith.constant 0 : index
    %1 = vector.load %arg2[%c0_1, %c0_2] : memref<24x64xf32, #tpu.memory_space<vmem>>, vector<24x64xf32>
    %cst = arith.constant dense<0.000000e+00> : vector<8x64xf32>
    %2 = tpu.matmul %0, %1, %cst {dimension_numbers = #tpu.dot_dimension_numbers<[1], [0], [0], [1], [0, 0, 1, 1], [], []>} : vector<8x24xf32>, vector<24x64xf32>, vector<8x64xf32> -> vector<8x64xf32>
    %c0_3 = arith.constant 0 : index
    %c0_4 = arith.constant 0 : index
    %3 = vector.load %arg3[%c0_3, %c0_4] : memref<1x64xf32, #tpu.memory_space<vmem>>, vector<1x64xf32>
    %4 = vector.broadcast %3 : vector<1x64xf32> to vector<8x64xf32>
    %5 = arith.addf %2, %4 : vector<8x64xf32>
    %cst_5 = arith.constant 0.000000e+00 : f32
    %6 = vector.broadcast %cst_5 : f32 to vector<8x64xf32>
    %7 = arith.maximumf %5, %6 : vector<8x64xf32>
    %c0_6 = arith.constant 0 : index
    %c0_7 = arith.constant 0 : index
    %8 = vector.load %arg4[%c0_6, %c0_7] : memref<64x4xf32, #tpu.memory_space<vmem>>, vector<64x4xf32>
    %cst_8 = arith.constant dense<0.000000e+00> : vector<8x4xf32>
    %9 = tpu.matmul %7, %8, %cst_8 {dimension_numbers = #tpu.dot_dimension_numbers<[1], [0], [0], [1], [0, 0, 1, 1], [], []>} : vector<8x64xf32>, vector<64x4xf32>, vector<8x4xf32> -> vector<8x4xf32>
    %c0_9 = arith.constant 0 : index
    %c0_10 = arith.constant 0 : index
    %10 = vector.load %arg5[%c0_9, %c0_10] : memref<1x4xf32, #tpu.memory_space<vmem>>, vector<1x4xf32>
    %11 = vector.broadcast %10 : vector<1x4xf32> to vector<8x4xf32>
    %12 = arith.addf %9, %11 : vector<8x4xf32>
    %c0_11 = arith.constant 0 : index
    %c0_12 = arith.constant 0 : index
    %13 = vector.load %arg6[%c0_11, %c0_12] : memref<8x4xf32, #tpu.memory_space<vmem>>, vector<8x4xf32>
    tpu.vector_store %arg6[%c0_11, %c0_12], %12 {strides = array<i32>} : memref<8x4xf32, #tpu.memory_space<vmem>>, vector<8x4xf32>,
    return
  }
  func.func @transform_0(%arg0: i32) -> (i32, i32) {
    %c0_i32 = arith.constant 0 : i32
    %c0_i32_0 = arith.constant 0 : i32
    return %arg0, %c0_i32 : i32, i32
  }
  func.func @transform_1(%arg0: i32) -> (i32, i32) {
    %c0_i32 = arith.constant 0 : i32
    %c0_i32_0 = arith.constant 0 : i32
    %c0_i32_1 = arith.constant 0 : i32
    return %c0_i32, %c0_i32_0 : i32, i32
  }
  func.func @transform_2(%arg0: i32) -> (i32, i32) {
    %c0_i32 = arith.constant 0 : i32
    %c0_i32_0 = arith.constant 0 : i32
    %c0_i32_1 = arith.constant 0 : i32
    return %c0_i32, %c0_i32_0 : i32, i32
  }
  func.func @transform_3(%arg0: i32) -> (i32, i32) {
    %c0_i32 = arith.constant 0 : i32
    %c0_i32_0 = arith.constant 0 : i32
    %c0_i32_1 = arith.constant 0 : i32
    return %c0_i32, %c0_i32_0 : i32, i32
  }
  func.func @transform_4(%arg0: i32) -> (i32, i32) {
    %c0_i32 = arith.constant 0 : i32
    %c0_i32_0 = arith.constant 0 : i32
    %c0_i32_1 = arith.constant 0 : i32
    return %c0_i32, %c0_i32_0 : i32, i32
  }
  func.func @transform_5(%arg0: i32) -> (i32, i32) {
    %c0_i32 = arith.constant 0 : i32
    %c0_i32_0 = arith.constant 0 : i32
    return %arg0, %c0_i32 : i32, i32
  }
}

</mosaic_0001>

<llo_original>
// kernel: tpu_custom_call.1
$region0: #{tpu_custom_call.1}
  #allocation0 [shape = 'u32[]', space=smem, size = 0x4, offset = 0x4, fixed_abs, tag = 'smem constant byte address 0x4 - core index']
  #allocation1 [shape = 'u32[144,128]{1,0:T(1,128)}', space=vmem, size = 0x12000, scoped, tag = 'internal scratch']
  %s0 = inlined_call_operand.vmem [shape: f32[2,24], index: 0, kind: input, shape index: {}]
  %s1 = inlined_call_operand.vmem [shape: f32[24,64], index: 1, kind: input, shape index: {}]
  %s2 = inlined_call_operand.vmem [shape: f32[1,64], index: 2, kind: input, shape index: {}]
  %s3 = inlined_call_operand.vmem [shape: f32[64,4], index: 3, kind: input, shape index: {}]
  %s4 = inlined_call_operand.vmem [shape: f32[1,4], index: 4, kind: input, shape index: {}]
  %s5 = inlined_call_operand.hbm [shape: f32[2,4], index: 5, kind: output, shape index: {}]
  %s6 = sld [smem:[#allocation0]]
  $region30: #{tpu_custom_call.1} parent=0
    _
  %s8 = ssub.s32 1, %s6
  %s9 = scalar_select 0, %s8, %s6
  $region1: #{tpu_custom_call.1} parent=0
    #allocation2 [shape = 'u8[4096]{0}', space=vmem, size = 0x1000, scoped, tag = 'output window, operand 0, single buffered']
    #allocation3 [shape = 's32[1]{0}', space=sflag, size = 0x4, scoped, tag = 'scoped memory for tpu_custom_call.1']
    %10 = vsyncpa [#allocation3], 0
    // Predicated region
    $region2: #{tpu_custom_call.1} parent=1 // pred_check
      _
    $region3: #{tpu_custom_call.1} parent=1 // pred_check_branch
      %12 = sbr.rel (0) target = $region5
    $region4: #{tpu_custom_call.1} parent=1 // pred_region
      _
    $region5: #{tpu_custom_call.1} parent=1 // pred_fallthru
      _
    // Predicated region
    $region6: #{tpu_custom_call.1} parent=1 // pred_check
      _
    $region7: #{tpu_custom_call.1} parent=1 // pred_check_branch
      %14 = sbr.rel (0) target = $region9
    $region8: #{tpu_custom_call.1} parent=1 // pred_region
      _
    $region9: #{tpu_custom_call.1} parent=1 // pred_fallthru
      _
    // Predicated region
    $region10: #{tpu_custom_call.1} parent=1 // pred_check
      _
    $region11: #{tpu_custom_call.1} parent=1 // pred_check_branch
      %16 = sbr.rel (0) target = $region13
    $region12: #{tpu_custom_call.1} parent=1 // pred_region
      _
    $region13: #{tpu_custom_call.1} parent=1 // pred_fallthru
      _
    // Predicated region
    $region14: #{tpu_custom_call.1} parent=1 // pred_check
      _
    $region15: #{tpu_custom_call.1} parent=1 // pred_check_branch
      %18 = sbr.rel (0) target = $region17
    $region16: #{tpu_custom_call.1} parent=1 // pred_region
      _
    $region17: #{tpu_custom_call.1} parent=1 // pred_fallthru
      _
    // Predicated region
    $region18: #{tpu_custom_call.1} parent=1 // pred_check
      _
    $region19: #{tpu_custom_call.1} parent=1 // pred_check_branch
      %20 = sbr.rel (0) target = $region21
    $region20: #{tpu_custom_call.1} parent=1 // pred_region
      _
    $region21: #{tpu_custom_call.1} parent=1 // pred_fallthru
      _
    %v21 = vld [vmem:[%s0] sm:$0xff]
    %v22 = vld [vmem:[%s1] sm:$0xff]
    %v23 = vld [vmem:[%s1 + $0x8] sm:$0xff]
    %v24 = vld [vmem:[%s1 + $0x10] sm:$0xff]
    %v25 = vld [vmem:[%s2] sm:$0x1]
    %v27 = vlaneseq
    %v28 = vshrl.u32 %v27, 7
    %v29 = vsub.s32 0, %v28
    %v30 = vrot.slane %v25, %v29
    %vm32 = vcmask 195584
    %v34 = vsel %vm32, %v21, 0
    %36 = vmatprep.subr.mxu0 0.0
    %37 = vmatpush1.msra.mxu0 %v22
    %38 = vmatprep.subr.mxu0 0.0
    %39 = vmatpush1.msra.mxu0 %v23
    %40 = vmatprep.subr.mxu0 0.0
    %41 = vmatpush1.msra.mxu0 %v24
    %42 = vmatprep.subr.mxu0 0.0
    %43 = vmatpush1.msra.mxu0 0.0
    %44 = vmatprep.subr.mxu0 0.0
    %45 = vmatpush1.msra.mxu0 0.0
    %46 = vmatprep.subr.mxu0 0.0
    %47 = vmatpush1.msra.mxu0 0.0
    %48 = vmatprep.subr.mxu0 0.0
    %49 = vmatpush1.msra.mxu0 0.0
    %50 = vmatprep.subr.mxu0 0.0
    %51 = vmatpush1.msra.mxu0 0.0
    %52 = vmatprep.subr.mxu0 0.0
    %53 = vmatpush1.msra.mxu0 0.0
    %54 = vmatprep.subr.mxu0 0.0
    %55 = vmatpush1.msra.mxu0 0.0
    %56 = vmatprep.subr.mxu0 0.0
    %57 = vmatpush1.msra.mxu0 0.0
    %58 = vmatprep.subr.mxu0 0.0
    %59 = vmatpush1.msra.mxu0 0.0
    %60 = vmatprep.subr.mxu0 0.0
    %61 = vmatpush1.msra.mxu0 0.0
    %62 = vmatprep.subr.mxu0 0.0
    %63 = vmatpush1.msra.mxu0 0.0
    %64 = vmatprep.subr.mxu0 0.0
    %65 = vmatpush1.msra.mxu0 0.0
    %66 = vmatprep.subr.mxu0 0.0
    %67 = vmatpush1.msra.mxu0 0.0
    %68 = vmatprep.subr.mxu0 0.0
    %69 = vmatpush1.msra.mxu0 0.0
    %70 = vmatprep.subr.mxu0 0.0
    %71 = vmatpush1.msra.mxu0 0.0
    %72 = vmatprep.subr.mxu0 0.0
    %73 = vmatpush1.msra.mxu0 0.0
    %74 = vmatprep.subr.mxu0 0.0
    %75 = vmatpush1.msra.mxu0 0.0
    %76 = vmatprep.subr.mxu0 0.0
    %77 = vmatpush1.msra.mxu0 0.0
    %78 = vmatprep.subr.mxu0 0.0
    %79 = vmatpush1.msra.mxu0 0.0
    %80 = vmatprep.subr.mxu0 0.0
    %81 = vmatpush1.msra.mxu0 0.0
    %82 = vmatprep.subr.mxu0 0.0
    %83 = vmatpush1.msra.mxu0 0.0
    %84 = vmatprep.subr.mxu0 0.0
    %85 = vmatpush1.msra.mxu0 0.0
    %86 = vmatprep.subr.mxu0 0.0
    %87 = vmatpush1.msra.mxu0 0.0
    %88 = vmatprep.subr.mxu0 0.0
    %89 = vmatpush1.msra.mxu0 0.0
    %90 = vmatprep.subr.mxu0 0.0
    %91 = vmatpush1.msra.mxu0 0.0
    %92 = vmatprep.subr.mxu0 0.0
    %93 = vmatpush1.msra.mxu0 0.0
    %94 = vmatprep.subr.mxu0 0.0
    %95 = vmatpush1.msra.mxu0 0.0
    %96 = vmatprep.subr.mxu0 0.0
    %97 = vmatpush1.msra.mxu0 0.0
    %98 = vmatprep.subr.mxu0 0.0
    %99 = vmatpush1.msra.mxu0 0.0
    %100 = vmatprep.mubr.f32.mxu0 0.0
    %101 = vmatmul.mubr.f32.gmra.mrb[0].mxu0 %v34
    %v102 = vpop.f32.mrb[0].mxu0
    %v103 = vadd.f32 %v30, %v102
    %v104 = vpop.f32.mrb[0].mxu0
    %105 = vdwg.mxu0
    %v106 = vmax.f32 %v103, 0.0
    %v107 = vld [vmem:[%s3] sm:$0xff]
    %v108 = vld [vmem:[%s3 + $0x8] sm:$0xff]
    %v109 = vld [vmem:[%s3 + $0x10] sm:$0xff]
    %v110 = vld [vmem:[%s3 + $0x18] sm:$0xff]
    %v111 = vld [vmem:[%s3 + $0x20] sm:$0xff]
    %v112 = vld [vmem:[%s3 + $0x28] sm:$0xff]
    %v113 = vld [vmem:[%s3 + $0x30] sm:$0xff]
    %v114 = vld [vmem:[%s3 + $0x38] sm:$0xff]
    %v115 = vld [vmem:[%s4] sm:$0x1]
    %v117 = vlaneseq
    %v118 = vshrl.u32 %v117, 7
    %v119 = vsub.s32 0, %v118
    %v120 = vrot.slane %v115, %v119
    %vm122 = vcmask 523264
    %v124 = vsel %vm122, %v106, 0
    %126 = vmatprep.subr.mxu0 0.0
    %127 = vmatpush1.msra.mxu0 %v107
    %128 = vmatprep.subr.mxu0 0.0
    %129 = vmatpush1.msra.mxu0 %v108
    %130 = vmatprep.subr.mxu0 0.0
    %131 = vmatpush1.msra.mxu0 %v109
    %132 = vmatprep.subr.mxu0 0.0
    %133 = vmatpush1.msra.mxu0 %v110
    %134 = vmatprep.subr.mxu0 0.0
    %135 = vmatpush1.msra.mxu0 %v111
    %136 = vmatprep.subr.mxu0 0.0
    %137 = vmatpush1.msra.mxu0 %v112
    %138 = vmatprep.subr.mxu0 0.0
    %139 = vmatpush1.msra.mxu0 %v113
    %140 = vmatprep.subr.mxu0 0.0
    %141 = vmatpush1.msra.mxu0 %v114
    %142 = vmatprep.subr.mxu0 0.0
    %143 = vmatpush1.msra.mxu0 0.0
    %144 = vmatprep.subr.mxu0 0.0
    %145 = vmatpush1.msra.mxu0 0.0
    %146 = vmatprep.subr.mxu0 0.0
    %147 = vmatpush1.msra.mxu0 0.0
    %148 = vmatprep.subr.mxu0 0.0
    %149 = vmatpush1.msra.mxu0 0.0
    %150 = vmatprep.subr.mxu0 0.0
    %151 = vmatpush1.msra.mxu0 0.0
    %152 = vmatprep.subr.mxu0 0.0
    %153 = vmatpush1.msra.mxu0 0.0
    %154 = vmatprep.subr.mxu0 0.0
    %155 = vmatpush1.msra.mxu0 0.0
    %156 = vmatprep.subr.mxu0 0.0
    %157 = vmatpush1.msra.mxu0 0.0
    %158 = vmatprep.subr.mxu0 0.0
    %159 = vmatpush1.msra.mxu0 0.0
    %160 = vmatprep.subr.mxu0 0.0
    %161 = vmatpush1.msra.mxu0 0.0
    %162 = vmatprep.subr.mxu0 0.0
    %163 = vmatpush1.msra.mxu0 0.0
    %164 = vmatprep.subr.mxu0 0.0
    %165 = vmatpush1.msra.mxu0 0.0
    %166 = vmatprep.subr.mxu0 0.0
    %167 = vmatpush1.msra.mxu0 0.0
    %168 = vmatprep.subr.mxu0 0.0
    %169 = vmatpush1.msra.mxu0 0.0
    %170 = vmatprep.subr.mxu0 0.0
    %171 = vmatpush1.msra.mxu0 0.0
    %172 = vmatprep.subr.mxu0 0.0
    %173 = vmatpush1.msra.mxu0 0.0
    %174 = vmatprep.subr.mxu0 0.0
    %175 = vmatpush1.msra.mxu0 0.0
    %176 = vmatprep.subr.mxu0 0.0
    %177 = vmatpush1.msra.mxu0 0.0
    %178 = vmatprep.subr.mxu0 0.0
    %179 = vmatpush1.msra.mxu0 0.0
    %180 = vmatprep.subr.mxu0 0.0
    %181 = vmatpush1.msra.mxu0 0.0
    %182 = vmatprep.subr.mxu0 0.0
    %183 = vmatpush1.msra.mxu0 0.0
    %184 = vmatprep.subr.mxu0 0.0
    %185 = vmatpush1.msra.mxu0 0.0
    %186 = vmatprep.subr.mxu0 0.0
    %187 = vmatpush1.msra.mxu0 0.0
    %188 = vmatprep.subr.mxu0 0.0
    %189 = vmatpush1.msra.mxu0 0.0
    %190 = vmatprep.mubr.f32.mxu0 0.0
    %191 = vmatmul.mubr.f32.gmra.mrb[0].mxu0 %v124
    %v192 = vpop.f32.mrb[0].mxu0
    %v193 = vadd.f32 %v120, %v192
    %v194 = vpop.f32.mrb[0].mxu0
    %195 = vdwg.mxu0
    %vm196 = vcmask 31744
    %197 = vst.msk [vmem:[#allocation2] sm:$0xff] %vm196, %v193
    // Predicated region
    $region22: #{tpu_custom_call.1} parent=1 // pred_check
      _
    $region23: #{tpu_custom_call.1} parent=1 // pred_check_branch
      %199 = sbr.rel (0) target = $region25
    $region24: #{tpu_custom_call.1} parent=1 // pred_region
      %s201 = ssub.s32 128, 32
      %202 = vsyncadd [#allocation3], %s201
      %s203 = sshll.u32 [#allocation2], 4
      %s204 = int_to_ptr.vmem [resolvable:$true] %s203
      %209 = dma.vmem_to_hbm [thread:$0]  %s204, 32, %s5, [#allocation3], 32, 32, 2
    $region25: #{tpu_custom_call.1} parent=1 // pred_fallthru
      _
    // Predicated region
    $region26: #{tpu_custom_call.1} parent=1 // pred_check
      _
    $region27: #{tpu_custom_call.1} parent=1 // pred_check_branch
      %211 = sbr.rel (0) target = $region29
    $region28: #{tpu_custom_call.1} parent=1 // pred_region
      %212 = dma.done [#allocation3], 128
    $region29: #{tpu_custom_call.1} parent=1 // pred_fallthru
      _
    %213 = vsyncpa [#allocation3], 1

</llo_original>
